<compile_context>
chip_gen: v6e
topology: v6e:2x2x1
jax: 0.10.0
libtpu: 0.0.40
codegen_flags: <defaults>
</compile_context>

<pallas_src>
import functools
import math

import jax
import jax.numpy as jnp
from jax.experimental import pallas as pl
from jax.experimental.pallas import tpu as pltpu


def _round_up(x: int, m: int) -> int:
    return (x + m - 1) // m * m


# --------------------------------------------------------------------------
# Kernels
# --------------------------------------------------------------------------
def _fused_single_step_kernel(x_ref, w1_ref, b1_ref, wh_ref, bh_ref, out_ref):
    """Whole K reduction in one step: relu(x@W1+b1) @ [Wp|Wv] + [bp|bv]."""
    h = jnp.dot(x_ref[...], w1_ref[...], preferred_element_type=jnp.float32)
    h = jnp.maximum(h + b1_ref[...], 0.0)
    heads = jnp.dot(h.astype(wh_ref.dtype), wh_ref[...],
                    preferred_element_type=jnp.float32)
    out_ref[...] = (heads + bh_ref[...]).astype(out_ref.dtype)


def _fused_ktiled_kernel(x_ref, w1_ref, b1_ref, wh_ref, bh_ref, out_ref,
                         acc_ref):
    """K-tiled variant: accumulator seeded with b1, heads epilogue on last k."""
    k = pl.program_id(1)

    @pl.when(k == 0)
    def _():
        acc_ref[...] = jnp.broadcast_to(b1_ref[...], acc_ref.shape)

    acc_ref[...] += jnp.dot(x_ref[...], w1_ref[...],
                            preferred_element_type=jnp.float32)

    @pl.when(k == pl.num_programs(1) - 1)
    def _():
        h = jnp.maximum(acc_ref[...], 0.0)
        heads = jnp.dot(h.astype(wh_ref.dtype), wh_ref[...],
                        preferred_element_type=jnp.float32)
        out_ref[...] = (heads + bh_ref[...]).astype(out_ref.dtype)


# --------------------------------------------------------------------------
# Tile-size selection (all static Python arithmetic at trace time)
# --------------------------------------------------------------------------
def _choose_tm(B: int) -> int:
    """>=2 parallel batch blocks when possible (v7x 2 TCs), minimal padding."""
    b8 = _round_up(B, 8)
    if b8 <= 8:
        return 8
    nblocks = max(2, -(-b8 // 256))            # ceil(b8/256), but at least 2
    return _round_up(-(-b8 // nblocks), 8)     # tile <= 256, pad <= 7 rows/blk


def _vmem_bytes(tm: int, tk: int, hidden: int, n_pad: int, multi_k: bool) -> int:
    dbl_in = 2 * (tm * tk + tk * hidden) * 2                 # bf16, dbl-buffered
    dbl_out = 2 * tm * n_pad * 4                             # f32 output tile
    fixed = 2 * (hidden * n_pad * 2 + hidden * 4 + n_pad * 4)  # heads W + biases
    acc = tm * hidden * 4 if multi_k else 0
    return dbl_in + dbl_out + fixed + acc


def _choose_tk(k128: int, tm: int, hidden: int, n_pad: int, budget: int) -> int:
    if _vmem_bytes(tm, k128, hidden, n_pad, multi_k=False) <= budget:
        return k128                                          # single K step
    for cand in (4096, 2048, 1024, 512, 256, 128):
        if cand < k128 and k128 % cand == 0 and \
                _vmem_bytes(tm, cand, hidden, n_pad, multi_k=True) <= budget:
            return cand
    return 128


def _vmem_budget_and_limit():
    """Budget tiles against the actual chip (v7x: 64 MiB, v5e/v6e: 128 MiB)."""
    phys = 64 * 1024 * 1024
    try:
        cap = getattr(pltpu.get_tpu_info(), "vmem_capacity_bytes", None)
        if cap:
            phys = int(cap)
    except Exception:
        pass
    budget = max(24 * 1024 * 1024, int(phys * 0.55))
    limit = max(32 * 1024 * 1024,
                min(phys - 8 * 1024 * 1024, budget + 8 * 1024 * 1024))
    return budget, limit


# --------------------------------------------------------------------------
# Pallas-backed model forward (weights are pre-padded / pre-cast at init)
# --------------------------------------------------------------------------
def _pallas_forward(x, w1_p, b1_p, wh_p, bh_p, *, num_actions, vmem_budget,
                    vmem_limit):
    B = x.shape[0]
    K = math.prod(x.shape[1:])
    k128, hidden = w1_p.shape
    n_pad = wh_p.shape[1]

    tm = _choose_tm(B)
    b_pad = _round_up(B, tm)
    tk = _choose_tk(k128, tm, hidden, n_pad, vmem_budget)
    single_step = (tk == k128)

    # Row-major flatten == torch x.view(B, -1); pad only if actually needed.
    x2d = x.reshape(B, K).astype(jnp.bfloat16)
    pad_b, pad_k = b_pad - B, k128 - K
    if pad_b or pad_k:
        x2d = jnp.pad(x2d, ((0, pad_b), (0, pad_k)))

    nb = b_pad // tm
    if single_step:
        grid = (nb,)
        in_specs = [
            pl.BlockSpec((tm, k128), lambda i: (i, 0)),          # x tile
            pl.BlockSpec((k128, hidden), lambda i: (0, 0)),      # W1 (whole)
            pl.BlockSpec((1, hidden), lambda i: (0, 0)),         # b1
            pl.BlockSpec((hidden, n_pad), lambda i: (0, 0)),     # [Wp|Wv]
            pl.BlockSpec((1, n_pad), lambda i: (0, 0)),          # [bp|bv]
        ]
        out_spec = pl.BlockSpec((tm, n_pad), lambda i: (i, 0))
        scratch = []
        kernel = _fused_single_step_kernel
        dims = ("parallel",)
    else:
        grid = (nb, k128 // tk)
        in_specs = [
            pl.BlockSpec((tm, tk), lambda i, k: (i, k)),
            pl.BlockSpec((tk, hidden), lambda i, k: (k, 0)),
            pl.BlockSpec((1, hidden), lambda i, k: (0, 0)),
            pl.BlockSpec((hidden, n_pad), lambda i, k: (0, 0)),
            pl.BlockSpec((1, n_pad), lambda i, k: (0, 0)),
        ]
        out_spec = pl.BlockSpec((tm, n_pad), lambda i, k: (i, 0))
        scratch = [pltpu.VMEM((tm, hidden), jnp.float32)]
        kernel = _fused_ktiled_kernel
        dims = ("parallel", "arbitrary")

    out = pl.pallas_call(
        kernel,
        out_shape=jax.ShapeDtypeStruct((b_pad, n_pad), jnp.float32),
        grid_spec=pltpu.PrefetchScalarGridSpec(
            num_scalar_prefetch=0,
            grid=grid,
            in_specs=in_specs,
            out_specs=out_spec,
            scratch_shapes=scratch,
        ),
        compiler_params=pltpu.CompilerParams(
            dimension_semantics=dims,
            vmem_limit_bytes=vmem_limit,
        ),
    )(x2d, w1_p, b1_p, wh_p, bh_p)

    policy_logits = out[:B, :num_actions]
    # tanh applied only to the single value column (negligible; frees EUP/VPU
    # work inside the kernel per perf review).
    value = jnp.tanh(out[:B, num_actions:num_actions + 1])   # [B, 1]
    return policy_logits, value


class PallasMCTSModel:
    """Policy/value net; padding + bf16 casting of weights happens ONCE here."""

    def __init__(self, w1, b1, wp, bp, wv, bv):
        K, hidden = w1.shape
        num_actions = wp.shape[1]
        k128 = _round_up(K, 128)
        n_pad = _round_up(num_actions + 1, 128)      # policy cols + value col
        bf16 = jnp.bfloat16

        w1_p = jnp.zeros((k128, hidden), bf16).at[:K, :].set(w1.astype(bf16))
        b1_p = b1.reshape(1, hidden).astype(jnp.float32)
        wh_p = jnp.zeros((hidden, n_pad), bf16)
        wh_p = wh_p.at[:, :num_actions].set(wp.astype(bf16))
        wh_p = wh_p.at[:, num_actions].set(wv[:, 0].astype(bf16))
        bh_p = jnp.zeros((1, n_pad), jnp.float32)
        bh_p = bh_p.at[0, :num_actions].set(bp.astype(jnp.float32))
        bh_p = bh_p.at[0, num_actions].set(bv[0].astype(jnp.float32))

        self.w1_p, self.b1_p, self.wh_p, self.bh_p = jax.device_put(
            (w1_p, b1_p, wh_p, bh_p))
        self.num_actions = num_actions

        budget, limit = _vmem_budget_and_limit()
        self._fwd = jax.jit(functools.partial(
            _pallas_forward, num_actions=num_actions,
            vmem_budget=budget, vmem_limit=limit))

    def __call__(self, x):
        return self._fwd(x, self.w1_p, self.b1_p, self.wh_p, self.bh_p)


# --------------------------------------------------------------------------
# AdapterWrapper: pure dispatch, mirroring the PyTorch module
# --------------------------------------------------------------------------
class AdapterWrapper:
    """forward(x) == adapter_fn(model, x); model is the Pallas-backed net."""

    def __init__(self, model, adapter_fn):
        self.model = model
        self.adapter_fn = adapter_fn

    def __call__(self, x):
        return self.adapter_fn(self.model, x)


def mcts_adapter(model, x):
    policy_logits, value = model(x)
    return policy_logits, value[:, 0]                 # value.squeeze(-1)


# --------------------------------------------------------------------------
# Pure-JAX reference (bf16 weights/acts to match kernel numerics)
# --------------------------------------------------------------------------
def _reference_forward(x, w1, b1, wp, bp, wv, bv):
    bf = jnp.bfloat16
    x2d = x.reshape(x.shape[0], -1).astype(bf).astype(jnp.float32)
    w1b = w1.astype(bf).astype(jnp.float32)
    h = jnp.maximum(x2d @ w1b + b1, 0.0)
    hb = h.astype(bf).astype(jnp.float32)
    policy = hb @ wp.astype(bf).astype(jnp.float32) + bp
    value = jnp.tanh(hb @ wv.astype(bf).astype(jnp.float32) + bv)[:, 0]
    return policy, value


if __name__ == "__main__":
    B, C, H, W = 2, 4, 16, 16
    HIDDEN, A = 128, 64
    K = C * H * W

    key = jax.random.PRNGKey(0)
    k1, k2, k3, k4, k5, k6, k7 = jax.random.split(key, 7)
    x = jax.random.normal(k1, (B, C, H, W), jnp.float32)
    w1 = jax.random.normal(k2, (K, HIDDEN), jnp.float32) / jnp.sqrt(K)
    b1 = jax.random.normal(k3, (HIDDEN,), jnp.float32) * 0.1
    wp = jax.random.normal(k4, (HIDDEN, A), jnp.float32) / jnp.sqrt(HIDDEN)
    bp = jax.random.normal(k5, (A,), jnp.float32) * 0.1
    wv = jax.random.normal(k6, (HIDDEN, 1), jnp.float32) / jnp.sqrt(HIDDEN)
    bv = jax.random.normal(k7, (1,), jnp.float32) * 0.1

    model = PallasMCTSModel(w1, b1, wp, bp, wv, bv)
    wrapper = AdapterWrapper(model, mcts_adapter)

    policy, value = wrapper(x)
    (policy, value) = jax.block_until_ready((policy, value))

    ref_policy, ref_value = _reference_forward(x, w1, b1, wp, bp, wv, bv)
    assert policy.shape == (B, A) and value.shape == (B,)
    assert jnp.allclose(policy, ref_policy, atol=2e-2, rtol=2e-2), "policy mismatch"
    assert jnp.allclose(value, ref_value, atol=2e-2, rtol=2e-2), "value mismatch"

    print("KERNEL_OK")
</pallas_src>

<mosaic_0001>
module attributes {stable_mosaic.version = 11 : i64} {
  func.func @_fused_single_step_kernel(%arg0: i32, %arg1: memref<8x1024xbf16, #tpu.memory_space<vmem>>, %arg2: memref<1024x128xbf16, #tpu.memory_space<vmem>>, %arg3: memref<1x128xf32, #tpu.memory_space<vmem>>, %arg4: memref<128x128xbf16, #tpu.memory_space<vmem>>, %arg5: memref<1x128xf32, #tpu.memory_space<vmem>>, %arg6: memref<8x128xf32, #tpu.memory_space<vmem>>) attributes {dimension_semantics = [#tpu.dimension_semantics<parallel>], iteration_bounds = array<i64: 1>, scalar_prefetch = 0 : i64, scratch_operands = 0 : i64, tpu.core_type = #tpu.core_type<tc>, window_params = [{transform_indices = @transform_0, window_bounds = array<i64: 8, 1024>}, {pipeline_mode = #tpu.pipeline_mode<synchronous>, transform_indices = @transform_1, window_bounds = array<i64: 1024, 128>}, {pipeline_mode = #tpu.pipeline_mode<synchronous>, transform_indices = @transform_2, window_bounds = array<i64: 1, 128>}, {pipeline_mode = #tpu.pipeline_mode<synchronous>, transform_indices = @transform_3, window_bounds = array<i64: 128, 128>}, {pipeline_mode = #tpu.pipeline_mode<synchronous>, transform_indices = @transform_4, window_bounds = array<i64: 1, 128>}, {transform_indices = @transform_5, window_bounds = array<i64: 8, 128>}]} {
    %c0 = arith.constant 0 : index
    %c0_0 = arith.constant 0 : index
    %0 = vector.load %arg1[%c0, %c0_0] : memref<8x1024xbf16, #tpu.memory_space<vmem>>, vector<8x1024xbf16>
    %c0_1 = arith.constant 0 : index
    %c0_2 = arith.constant 0 : index
    %1 = vector.load %arg2[%c0_1, %c0_2] : memref<1024x128xbf16, #tpu.memory_space<vmem>>, vector<1024x128xbf16>
    %cst = arith.constant dense<0.000000e+00> : vector<8x128xf32>
    %2 = tpu.matmul %0, %1, %cst {dimension_numbers = #tpu.dot_dimension_numbers<[1], [0], [0], [1], [0, 0, 1, 1], [], []>} : vector<8x1024xbf16>, vector<1024x128xbf16>, vector<8x128xf32> -> vector<8x128xf32>
    %c0_3 = arith.constant 0 : index
    %c0_4 = arith.constant 0 : index
    %3 = vector.load %arg3[%c0_3, %c0_4] : memref<1x128xf32, #tpu.memory_space<vmem>>, vector<1x128xf32>
    %4 = vector.broadcast %3 : vector<1x128xf32> to vector<8x128xf32>
    %5 = arith.addf %2, %4 : vector<8x128xf32>
    %cst_5 = arith.constant 0.000000e+00 : f32
    %6 = vector.broadcast %cst_5 : f32 to vector<8x128xf32>
    %7 = arith.maximumf %5, %6 : vector<8x128xf32>
    %8 = arith.truncf %7 : vector<8x128xf32> to vector<8x128xbf16>
    %c0_6 = arith.constant 0 : index
    %c0_7 = arith.constant 0 : index
    %9 = vector.load %arg4[%c0_6, %c0_7] : memref<128x128xbf16, #tpu.memory_space<vmem>>, vector<128x128xbf16>
    %cst_8 = arith.constant dense<0.000000e+00> : vector<8x128xf32>
    %10 = tpu.matmul %8, %9, %cst_8 {dimension_numbers = #tpu.dot_dimension_numbers<[1], [0], [0], [1], [0, 0, 1, 1], [], []>} : vector<8x128xbf16>, vector<128x128xbf16>, vector<8x128xf32> -> vector<8x128xf32>
    %c0_9 = arith.constant 0 : index
    %c0_10 = arith.constant 0 : index
    %11 = vector.load %arg5[%c0_9, %c0_10] : memref<1x128xf32, #tpu.memory_space<vmem>>, vector<1x128xf32>
    %12 = vector.broadcast %11 : vector<1x128xf32> to vector<8x128xf32>
    %13 = arith.addf %10, %12 : vector<8x128xf32>
    %c0_11 = arith.constant 0 : index
    %c0_12 = arith.constant 0 : index
    %14 = vector.load %arg6[%c0_11, %c0_12] : memref<8x128xf32, #tpu.memory_space<vmem>>, vector<8x128xf32>
    tpu.vector_store %arg6[%c0_11, %c0_12], %13 {strides = array<i32>} : memref<8x128xf32, #tpu.memory_space<vmem>>, vector<8x128xf32>,
    return
  }
  func.func @transform_0(%arg0: i32) -> (i32, i32) {
    %c0_i32 = arith.constant 0 : i32
    %c0_i32_0 = arith.constant 0 : i32
    return %arg0, %c0_i32 : i32, i32
  }
  func.func @transform_1(%arg0: i32) -> (i32, i32) {
    %c0_i32 = arith.constant 0 : i32
    %c0_i32_0 = arith.constant 0 : i32
    %c0_i32_1 = arith.constant 0 : i32
    return %c0_i32, %c0_i32_0 : i32, i32
  }
  func.func @transform_2(%arg0: i32) -> (i32, i32) {
    %c0_i32 = arith.constant 0 : i32
    %c0_i32_0 = arith.constant 0 : i32
    %c0_i32_1 = arith.constant 0 : i32
    return %c0_i32, %c0_i32_0 : i32, i32
  }
  func.func @transform_3(%arg0: i32) -> (i32, i32) {
    %c0_i32 = arith.constant 0 : i32
    %c0_i32_0 = arith.constant 0 : i32
    %c0_i32_1 = arith.constant 0 : i32
    return %c0_i32, %c0_i32_0 : i32, i32
  }
  func.func @transform_4(%arg0: i32) -> (i32, i32) {
    %c0_i32 = arith.constant 0 : i32
    %c0_i32_0 = arith.constant 0 : i32
    %c0_i32_1 = arith.constant 0 : i32
    return %c0_i32, %c0_i32_0 : i32, i32
  }
  func.func @transform_5(%arg0: i32) -> (i32, i32) {
    %c0_i32 = arith.constant 0 : i32
    %c0_i32_0 = arith.constant 0 : i32
    return %arg0, %c0_i32 : i32, i32
  }
}

</mosaic_0001>

<llo_original>
// kernel: _pallas_forward.1
$region0: #{_pallas_forward.1}
  #allocation0 [shape = 'u32[]', space=smem, size = 0x4, offset = 0x4, fixed_abs, tag = 'smem constant byte address 0x4 - core index']
  #allocation1 [shape = 'u32[144,128]{1,0:T(1,128)}', space=vmem, size = 0x12000, scoped, tag = 'internal scratch']
  %s0 = inlined_call_operand.vmem [shape: bf16[8,1024], index: 0, kind: input, shape index: {}]
  %s1 = inlined_call_operand.hbm [shape: bf16[1024,128], index: 1, kind: input, shape index: {}]
  %s2 = inlined_call_operand.vmem [shape: f32[1,128], index: 2, kind: input, shape index: {}]
  %s3 = inlined_call_operand.vmem [shape: bf16[128,128], index: 3, kind: input, shape index: {}]
  %s4 = inlined_call_operand.vmem [shape: f32[1,128], index: 4, kind: input, shape index: {}]
  %s5 = inlined_call_operand.vmem [shape: f32[8,128], index: 5, kind: output, shape index: {}]
  %s6 = sld [smem:[#allocation0]]
  $region34: #{_pallas_forward.1} parent=0
    _
  %s8 = ssub.s32 1, %s6
  %s9 = scalar_select 0, %s8, %s6
  $region1: #{_pallas_forward.1} parent=0
    #allocation2 [shape = 'u8[262144]{0}', space=vmem, size = 0x40000, scoped, tag = 'input window, operand 1, single buffered']
    #allocation3 [shape = 's32[1]{0}', space=sflag, size = 0x4, scoped, tag = 'scoped memory for _pallas_forward.1']
    %10 = vsyncpa [#allocation3], 0
    // Predicated region
    $region2: #{_pallas_forward.1} parent=1 // pred_check
      _
    $region3: #{_pallas_forward.1} parent=1 // pred_check_branch
      %12 = sbr.rel (0) target = $region5
    $region4: #{_pallas_forward.1} parent=1 // pred_region
      _
    $region5: #{_pallas_forward.1} parent=1 // pred_fallthru
      _
    // Predicated region
    $region6: #{_pallas_forward.1} parent=1 // pred_check
      _
    $region7: #{_pallas_forward.1} parent=1 // pred_check_branch
      %14 = sbr.rel (0) target = $region9
    $region8: #{_pallas_forward.1} parent=1 // pred_region
      %s16 = ssub.s32 8192, 8192
      %17 = vsyncadd [#allocation3], %s16
      %s18 = sshll.u32 [#allocation2], 4
      %s19 = int_to_ptr.vmem [resolvable:$true] %s18
      %24 = dma.hbm_to_vmem [thread:$0]  %s1, 8192, %s19, [#allocation3], 64, 64, 4
    $region9: #{_pallas_forward.1} parent=1 // pred_fallthru
      _
    // Predicated region
    $region10: #{_pallas_forward.1} parent=1 // pred_check
      _
    $region11: #{_pallas_forward.1} parent=1 // pred_check_branch
      %26 = sbr.rel (0) target = $region13
    $region12: #{_pallas_forward.1} parent=1 // pred_region
      _
    $region13: #{_pallas_forward.1} parent=1 // pred_fallthru
      _
    // Predicated region
    $region14: #{_pallas_forward.1} parent=1 // pred_check
      _
    $region15: #{_pallas_forward.1} parent=1 // pred_check_branch
      %28 = sbr.rel (0) target = $region17
    $region16: #{_pallas_forward.1} parent=1 // pred_region
      _
    $region17: #{_pallas_forward.1} parent=1 // pred_fallthru
      _
    // Predicated region
    $region18: #{_pallas_forward.1} parent=1 // pred_check
      _
    $region19: #{_pallas_forward.1} parent=1 // pred_check_branch
      %30 = sbr.rel (0) target = $region21
    $region20: #{_pallas_forward.1} parent=1 // pred_region
      _
    $region21: #{_pallas_forward.1} parent=1 // pred_fallthru
      _
    // Predicated region
    $region22: #{_pallas_forward.1} parent=1 // pred_check
      _
    $region23: #{_pallas_forward.1} parent=1 // pred_check_branch
      %32 = sbr.rel (0) target = $region25
    $region24: #{_pallas_forward.1} parent=1 // pred_region
      %33 = dma.done [#allocation3], 8192
    $region25: #{_pallas_forward.1} parent=1 // pred_fallthru
      _
    %v35 = vld [vmem:[%s0] sm:$0xff]
    %v36 = vld [vmem:[%s0 + $0x8] sm:$0xff]
    %v37 = vld [vmem:[%s0 + $0x10] sm:$0xff]
    %v38 = vld [vmem:[%s0 + $0x18] sm:$0xff]
    %v39 = vld [vmem:[#allocation2] sm:$0xf]
    %v40 = vld [vmem:[#allocation2 + $0x4] sm:$0xf]
    %v41 = vld [vmem:[#allocation2 + $0x8] sm:$0xf]
    %v42 = vld [vmem:[#allocation2 + $0xc] sm:$0xf]
    %v43 = vld [vmem:[#allocation2 + $0x10] sm:$0xf]
    %v44 = vld [vmem:[#allocation2 + $0x14] sm:$0xf]
    %v45 = vld [vmem:[#allocation2 + $0x18] sm:$0xf]
    %v46 = vld [vmem:[#allocation2 + $0x1c] sm:$0xf]
    %v47 = vld [vmem:[#allocation2 + $0x20] sm:$0xf]
    %v48 = vld [vmem:[#allocation2 + $0x24] sm:$0xf]
    %v49 = vld [vmem:[#allocation2 + $0x28] sm:$0xf]
    %v50 = vld [vmem:[#allocation2 + $0x2c] sm:$0xf]
    %v51 = vld [vmem:[#allocation2 + $0x30] sm:$0xf]
    %v52 = vld [vmem:[#allocation2 + $0x34] sm:$0xf]
    %v53 = vld [vmem:[#allocation2 + $0x38] sm:$0xf]
    %v54 = vld [vmem:[#allocation2 + $0x3c] sm:$0xf]
    %v55 = vld [vmem:[#allocation2 + $0x40] sm:$0xf]
    %v56 = vld [vmem:[#allocation2 + $0x44] sm:$0xf]
    %v57 = vld [vmem:[#allocation2 + $0x48] sm:$0xf]
    %v58 = vld [vmem:[#allocation2 + $0x4c] sm:$0xf]
    %v59 = vld [vmem:[#allocation2 + $0x50] sm:$0xf]
    %v60 = vld [vmem:[#allocation2 + $0x54] sm:$0xf]
    %v61 = vld [vmem:[#allocation2 + $0x58] sm:$0xf]
    %v62 = vld [vmem:[#allocation2 + $0x5c] sm:$0xf]
    %v63 = vld [vmem:[#allocation2 + $0x60] sm:$0xf]
    %v64 = vld [vmem:[#allocation2 + $0x64] sm:$0xf]
    %v65 = vld [vmem:[#allocation2 + $0x68] sm:$0xf]
    %v66 = vld [vmem:[#allocation2 + $0x6c] sm:$0xf]
    %v67 = vld [vmem:[#allocation2 + $0x70] sm:$0xf]
    %v68 = vld [vmem:[#allocation2 + $0x74] sm:$0xf]
    %v69 = vld [vmem:[#allocation2 + $0x78] sm:$0xf]
    %v70 = vld [vmem:[#allocation2 + $0x7c] sm:$0xf]
    %v71 = vld [vmem:[#allocation2 + $0x80] sm:$0xf]
    %v72 = vld [vmem:[#allocation2 + $0x84] sm:$0xf]
    %v73 = vld [vmem:[#allocation2 + $0x88] sm:$0xf]
    %v74 = vld [vmem:[#allocation2 + $0x8c] sm:$0xf]
    %v75 = vld [vmem:[#allocation2 + $0x90] sm:$0xf]
    %v76 = vld [vmem:[#allocation2 + $0x94] sm:$0xf]
    %v77 = vld [vmem:[#allocation2 + $0x98] sm:$0xf]
    %v78 = vld [vmem:[#allocation2 + $0x9c] sm:$0xf]
    %v79 = vld [vmem:[#allocation2 + $0xa0] sm:$0xf]
    %v80 = vld [vmem:[#allocation2 + $0xa4] sm:$0xf]
    %v81 = vld [vmem:[#allocation2 + $0xa8] sm:$0xf]
    %v82 = vld [vmem:[#allocation2 + $0xac] sm:$0xf]
    %v83 = vld [vmem:[#allocation2 + $0xb0] sm:$0xf]
    %v84 = vld [vmem:[#allocation2 + $0xb4] sm:$0xf]
    %v85 = vld [vmem:[#allocation2 + $0xb8] sm:$0xf]
    %v86 = vld [vmem:[#allocation2 + $0xbc] sm:$0xf]
    %v87 = vld [vmem:[#allocation2 + $0xc0] sm:$0xf]
    %v88 = vld [vmem:[#allocation2 + $0xc4] sm:$0xf]
    %v89 = vld [vmem:[#allocation2 + $0xc8] sm:$0xf]
    %v90 = vld [vmem:[#allocation2 + $0xcc] sm:$0xf]
    %v91 = vld [vmem:[#allocation2 + $0xd0] sm:$0xf]
    %v92 = vld [vmem:[#allocation2 + $0xd4] sm:$0xf]
    %v93 = vld [vmem:[#allocation2 + $0xd8] sm:$0xf]
    %v94 = vld [vmem:[#allocation2 + $0xdc] sm:$0xf]
    %v95 = vld [vmem:[#allocation2 + $0xe0] sm:$0xf]
    %v96 = vld [vmem:[#allocation2 + $0xe4] sm:$0xf]
    %v97 = vld [vmem:[#allocation2 + $0xe8] sm:$0xf]
    %v98 = vld [vmem:[#allocation2 + $0xec] sm:$0xf]
    %v99 = vld [vmem:[#allocation2 + $0xf0] sm:$0xf]
    %v100 = vld [vmem:[#allocation2 + $0xf4] sm:$0xf]
    %v101 = vld [vmem:[#allocation2 + $0xf8] sm:$0xf]
    %v102 = vld [vmem:[#allocation2 + $0xfc] sm:$0xf]
    %v103 = vld [vmem:[#allocation2 + $0x100] sm:$0xf]
    %v104 = vld [vmem:[#allocation2 + $0x104] sm:$0xf]
    %v105 = vld [vmem:[#allocation2 + $0x108] sm:$0xf]
    %v106 = vld [vmem:[#allocation2 + $0x10c] sm:$0xf]
    %v107 = vld [vmem:[#allocation2 + $0x110] sm:$0xf]
    %v108 = vld [vmem:[#allocation2 + $0x114] sm:$0xf]
    %v109 = vld [vmem:[#allocation2 + $0x118] sm:$0xf]
    %v110 = vld [vmem:[#allocation2 + $0x11c] sm:$0xf]
    %v111 = vld [vmem:[#allocation2 + $0x120] sm:$0xf]
    %v112 = vld [vmem:[#allocation2 + $0x124] sm:$0xf]
    %v113 = vld [vmem:[#allocation2 + $0x128] sm:$0xf]
    %v114 = vld [vmem:[#allocation2 + $0x12c] sm:$0xf]
    %v115 = vld [vmem:[#allocation2 + $0x130] sm:$0xf]
    %v116 = vld [vmem:[#allocation2 + $0x134] sm:$0xf]
    %v117 = vld [vmem:[#allocation2 + $0x138] sm:$0xf]
    %v118 = vld [vmem:[#allocation2 + $0x13c] sm:$0xf]
    %v119 = vld [vmem:[#allocation2 + $0x140] sm:$0xf]
    %v120 = vld [vmem:[#allocation2 + $0x144] sm:$0xf]
    %v121 = vld [vmem:[#allocation2 + $0x148] sm:$0xf]
    %v122 = vld [vmem:[#allocation2 + $0x14c] sm:$0xf]
    %v123 = vld [vmem:[#allocation2 + $0x150] sm:$0xf]
    %v124 = vld [vmem:[#allocation2 + $0x154] sm:$0xf]
    %v125 = vld [vmem:[#allocation2 + $0x158] sm:$0xf]
    %v126 = vld [vmem:[#allocation2 + $0x15c] sm:$0xf]
    %v127 = vld [vmem:[#allocation2 + $0x160] sm:$0xf]
    %v128 = vld [vmem:[#allocation2 + $0x164] sm:$0xf]
    %v129 = vld [vmem:[#allocation2 + $0x168] sm:$0xf]
    %v130 = vld [vmem:[#allocation2 + $0x16c] sm:$0xf]
    %v131 = vld [vmem:[#allocation2 + $0x170] sm:$0xf]
    %v132 = vld [vmem:[#allocation2 + $0x174] sm:$0xf]
    %v133 = vld [vmem:[#allocation2 + $0x178] sm:$0xf]
    %v134 = vld [vmem:[#allocation2 + $0x17c] sm:$0xf]
    %v135 = vld [vmem:[#allocation2 + $0x180] sm:$0xf]
    %v136 = vld [vmem:[#allocation2 + $0x184] sm:$0xf]
    %v137 = vld [vmem:[#allocation2 + $0x188] sm:$0xf]
    %v138 = vld [vmem:[#allocation2 + $0x18c] sm:$0xf]
    %v139 = vld [vmem:[#allocation2 + $0x190] sm:$0xf]
    %v140 = vld [vmem:[#allocation2 + $0x194] sm:$0xf]
    %v141 = vld [vmem:[#allocation2 + $0x198] sm:$0xf]
    %v142 = vld [vmem:[#allocation2 + $0x19c] sm:$0xf]
    %v143 = vld [vmem:[#allocation2 + $0x1a0] sm:$0xf]
    %v144 = vld [vmem:[#allocation2 + $0x1a4] sm:$0xf]
    %v145 = vld [vmem:[#allocation2 + $0x1a8] sm:$0xf]
    %v146 = vld [vmem:[#allocation2 + $0x1ac] sm:$0xf]
    %v147 = vld [vmem:[#allocation2 + $0x1b0] sm:$0xf]
    %v148 = vld [vmem:[#allocation2 + $0x1b4] sm:$0xf]
    %v149 = vld [vmem:[#allocation2 + $0x1b8] sm:$0xf]
    %v150 = vld [vmem:[#allocation2 + $0x1bc] sm:$0xf]
    %v151 = vld [vmem:[#allocation2 + $0x1c0] sm:$0xf]
    %v152 = vld [vmem:[#allocation2 + $0x1c4] sm:$0xf]
    %v153 = vld [vmem:[#allocation2 + $0x1c8] sm:$0xf]
    %v154 = vld [vmem:[#allocation2 + $0x1cc] sm:$0xf]
    %v155 = vld [vmem:[#allocation2 + $0x1d0] sm:$0xf]
    %v156 = vld [vmem:[#allocation2 + $0x1d4] sm:$0xf]
    %v157 = vld [vmem:[#allocation2 + $0x1d8] sm:$0xf]
    %v158 = vld [vmem:[#allocation2 + $0x1dc] sm:$0xf]
    %v159 = vld [vmem:[#allocation2 + $0x1e0] sm:$0xf]
    %v160 = vld [vmem:[#allocation2 + $0x1e4] sm:$0xf]
    %v161 = vld [vmem:[#allocation2 + $0x1e8] sm:$0xf]
    %v162 = vld [vmem:[#allocation2 + $0x1ec] sm:$0xf]
    %v163 = vld [vmem:[#allocation2 + $0x1f0] sm:$0xf]
    %v164 = vld [vmem:[#allocation2 + $0x1f4] sm:$0xf]
    %v165 = vld [vmem:[#allocation2 + $0x1f8] sm:$0xf]
    %v166 = vld [vmem:[#allocation2 + $0x1fc] sm:$0xf]
    %v167 = vld [vmem:[%s2] sm:$0x1]
    %v169 = vlaneseq
    %v170 = vshrl.u32 %v169, 7
    %v171 = vsub.s32 0, %v170
    %v172 = vrot.slane %v167, %v171
    %v178 = vunpack.c.l.b16 %v35
    %v179 = vunpack.c.h.b16 %v35
    %v180 = vunpack.c.l.b16 %v36
    %v181 = vunpack.c.h.b16 %v36
    %v182 = vunpack.c.l.b16 %v37
    %v183 = vunpack.c.h.b16 %v37
    %v184 = vunpack.c.l.b16 %v38
    %v185 = vunpack.c.h.b16 %v38
    %v186 = vpack.c.b16 %v178, %v178
    %v187 = vpack.c.b16 %v179, %v179
    %v188 = vpack.c.b16 %v180, %v180
    %v189 = vpack.c.b16 %v181, %v181
    %v190 = vpack.c.b16 %v182, %v182
    %v191 = vpack.c.b16 %v183, %v183
    %v192 = vpack.c.b16 %v184, %v184
    %v193 = vpack.c.b16 %v185, %v185
    %v330 = vunpack.c.l.b16 %v39
    %v331 = vunpack.c.l.b16 %v40
    %v332 = vunpack.c.l.b16 %v41
    %v333 = vunpack.c.l.b16 %v42
    %v334 = vunpack.c.l.b16 %v43
    %v335 = vunpack.c.l.b16 %v44
    %v336 = vunpack.c.l.b16 %v45
    %v337 = vunpack.c.l.b16 %v46
    %v338 = vunpack.c.l.b16 %v47
    %v339 = vunpack.c.l.b16 %v48
    %v340 = vunpack.c.l.b16 %v49
    %v341 = vunpack.c.l.b16 %v50
    %v342 = vunpack.c.l.b16 %v51
    %v343 = vunpack.c.l.b16 %v52
    %v344 = vunpack.c.l.b16 %v53
    %v345 = vunpack.c.l.b16 %v54
    %v346 = vunpack.c.l.b16 %v55
    %v347 = vunpack.c.l.b16 %v56
    %v348 = vunpack.c.l.b16 %v57
    %v349 = vunpack.c.l.b16 %v58
    %v350 = vunpack.c.l.b16 %v59
    %v351 = vunpack.c.l.b16 %v60
    %v352 = vunpack.c.l.b16 %v61
    %v353 = vunpack.c.l.b16 %v62
    %v354 = vunpack.c.l.b16 %v63
    %v355 = vunpack.c.l.b16 %v64
    %v356 = vunpack.c.l.b16 %v65
    %v357 = vunpack.c.l.b16 %v66
    %v358 = vunpack.c.l.b16 %v67
    %v359 = vunpack.c.l.b16 %v68
    %v360 = vunpack.c.l.b16 %v69
    %v361 = vunpack.c.l.b16 %v70
    %v362 = vunpack.c.l.b16 %v71
    %v363 = vunpack.c.l.b16 %v72
    %v364 = vunpack.c.l.b16 %v73
    %v365 = vunpack.c.l.b16 %v74
    %v366 = vunpack.c.l.b16 %v75
    %v367 = vunpack.c.l.b16 %v76
    %v368 = vunpack.c.l.b16 %v77
    %v369 = vunpack.c.l.b16 %v78
    %v370 = vunpack.c.l.b16 %v79
    %v371 = vunpack.c.l.b16 %v80
    %v372 = vunpack.c.l.b16 %v81
    %v373 = vunpack.c.l.b16 %v82
    %v374 = vunpack.c.l.b16 %v83
    %v375 = vunpack.c.l.b16 %v84
    %v376 = vunpack.c.l.b16 %v85
    %v377 = vunpack.c.l.b16 %v86
    %v378 = vunpack.c.l.b16 %v87
    %v379 = vunpack.c.l.b16 %v88
    %v380 = vunpack.c.l.b16 %v89
    %v381 = vunpack.c.l.b16 %v90
    %v382 = vunpack.c.l.b16 %v91
    %v383 = vunpack.c.l.b16 %v92
    %v384 = vunpack.c.l.b16 %v93
    %v385 = vunpack.c.l.b16 %v94
    %v386 = vunpack.c.l.b16 %v95
    %v387 = vunpack.c.l.b16 %v96
    %v388 = vunpack.c.l.b16 %v97
    %v389 = vunpack.c.l.b16 %v98
    %v390 = vunpack.c.l.b16 %v99
    %v391 = vunpack.c.l.b16 %v100
    %v392 = vunpack.c.l.b16 %v101
    %v393 = vunpack.c.l.b16 %v102
    %v394 = vunpack.c.l.b16 %v103
    %v395 = vunpack.c.l.b16 %v104
    %v396 = vunpack.c.l.b16 %v105
    %v397 = vunpack.c.l.b16 %v106
    %v398 = vunpack.c.l.b16 %v107
    %v399 = vunpack.c.l.b16 %v108
    %v400 = vunpack.c.l.b16 %v109
    %v401 = vunpack.c.l.b16 %v110
    %v402 = vunpack.c.l.b16 %v111
    %v403 = vunpack.c.l.b16 %v112
    %v404 = vunpack.c.l.b16 %v113
    %v405 = vunpack.c.l.b16 %v114
    %v406 = vunpack.c.l.b16 %v115
    %v407 = vunpack.c.l.b16 %v116
    %v408 = vunpack.c.l.b16 %v117
    %v409 = vunpack.c.l.b16 %v118
    %v410 = vunpack.c.l.b16 %v119
    %v411 = vunpack.c.l.b16 %v120
    %v412 = vunpack.c.l.b16 %v121
    %v413 = vunpack.c.l.b16 %v122
    %v414 = vunpack.c.l.b16 %v123
    %v415 = vunpack.c.l.b16 %v124
    %v416 = vunpack.c.l.b16 %v125
    %v417 = vunpack.c.l.b16 %v126
    %v418 = vunpack.c.l.b16 %v127
    %v419 = vunpack.c.l.b16 %v128
    %v420 = vunpack.c.l.b16 %v129
    %v421 = vunpack.c.l.b16 %v130
    %v422 = vunpack.c.l.b16 %v131
    %v423 = vunpack.c.l.b16 %v132
    %v424 = vunpack.c.l.b16 %v133
    %v425 = vunpack.c.l.b16 %v134
    %v426 = vunpack.c.l.b16 %v135
    %v427 = vunpack.c.l.b16 %v136
    %v428 = vunpack.c.l.b16 %v137
    %v429 = vunpack.c.l.b16 %v138
    %v430 = vunpack.c.l.b16 %v139
    %v431 = vunpack.c.l.b16 %v140
    %v432 = vunpack.c.l.b16 %v141
    %v433 = vunpack.c.l.b16 %v142
    %v434 = vunpack.c.l.b16 %v143
    %v435 = vunpack.c.l.b16 %v144
    %v436 = vunpack.c.l.b16 %v145
    %v437 = vunpack.c.l.b16 %v146
    %v438 = vunpack.c.l.b16 %v147
    %v439 = vunpack.c.l.b16 %v148
    %v440 = vunpack.c.l.b16 %v149
    %v441 = vunpack.c.l.b16 %v150
    %v442 = vunpack.c.l.b16 %v151
    %v443 = vunpack.c.l.b16 %v152
    %v444 = vunpack.c.l.b16 %v153
    %v445 = vunpack.c.l.b16 %v154
    %v446 = vunpack.c.l.b16 %v155
    %v447 = vunpack.c.l.b16 %v156
    %v448 = vunpack.c.l.b16 %v157
    %v449 = vunpack.c.l.b16 %v158
    %v450 = vunpack.c.l.b16 %v159
    %v451 = vunpack.c.l.b16 %v160
    %v452 = vunpack.c.l.b16 %v161
    %v453 = vunpack.c.l.b16 %v162
    %v454 = vunpack.c.l.b16 %v163
    %v455 = vunpack.c.l.b16 %v164
    %v456 = vunpack.c.l.b16 %v165
    %v457 = vunpack.c.l.b16 %v166
    %v458 = vpack.c.b16 %v331, %v330
    %v459 = vpack.c.b16 %v333, %v332
    %v460 = vpack.c.b16 %v335, %v334
    %v461 = vpack.c.b16 %v337, %v336
    %v462 = vpack.c.b16 %v339, %v338
    %v463 = vpack.c.b16 %v341, %v340
    %v464 = vpack.c.b16 %v343, %v342
    %v465 = vpack.c.b16 %v345, %v344
    %v466 = vpack.c.b16 %v347, %v346
    %v467 = vpack.c.b16 %v349, %v348
    %v468 = vpack.c.b16 %v351, %v350
    %v469 = vpack.c.b16 %v353, %v352
    %v470 = vpack.c.b16 %v355, %v354
    %v471 = vpack.c.b16 %v357, %v356
    %v472 = vpack.c.b16 %v359, %v358
    %v473 = vpack.c.b16 %v361, %v360
    %v474 = vpack.c.b16 %v363, %v362
    %v475 = vpack.c.b16 %v365, %v364
    %v476 = vpack.c.b16 %v367, %v366
    %v477 = vpack.c.b16 %v369, %v368
    %v478 = vpack.c.b16 %v371, %v370
    %v479 = vpack.c.b16 %v373, %v372
    %v480 = vpack.c.b16 %v375, %v374
    %v481 = vpack.c.b16 %v377, %v376
    %v482 = vpack.c.b16 %v379, %v378
    %v483 = vpack.c.b16 %v381, %v380
    %v484 = vpack.c.b16 %v383, %v382
    %v485 = vpack.c.b16 %v385, %v384
    %v486 = vpack.c.b16 %v387, %v386
    %v487 = vpack.c.b16 %v389, %v388
    %v488 = vpack.c.b16 %v391, %v390
    %v489 = vpack.c.b16 %v393, %v392
    %v490 = vpack.c.b16 %v395, %v394
    %v491 = vpack.c.b16 %v397, %v396
    %v492 = vpack.c.b16 %v399, %v398
    %v493 = vpack.c.b16 %v401, %v400
    %v494 = vpack.c.b16 %v403, %v402
    %v495 = vpack.c.b16 %v405, %v404
    %v496 = vpack.c.b16 %v407, %v406
    %v497 = vpack.c.b16 %v409, %v408
    %v498 = vpack.c.b16 %v411, %v410
    %v499 = vpack.c.b16 %v413, %v412
    %v500 = vpack.c.b16 %v415, %v414
    %v501 = vpack.c.b16 %v417, %v416
    %v502 = vpack.c.b16 %v419, %v418
    %v503 = vpack.c.b16 %v421, %v420
    %v504 = vpack.c.b16 %v423, %v422
    %v505 = vpack.c.b16 %v425, %v424
    %v506 = vpack.c.b16 %v427, %v426
    %v507 = vpack.c.b16 %v429, %v428
    %v508 = vpack.c.b16 %v431, %v430
    %v509 = vpack.c.b16 %v433, %v432
    %v510 = vpack.c.b16 %v435, %v434
    %v511 = vpack.c.b16 %v437, %v436
    %v512 = vpack.c.b16 %v439, %v438
    %v513 = vpack.c.b16 %v441, %v440
    %v514 = vpack.c.b16 %v443, %v442
    %v515 = vpack.c.b16 %v445, %v444
    %v516 = vpack.c.b16 %v447, %v446
    %v517 = vpack.c.b16 %v449, %v448
    %v518 = vpack.c.b16 %v451, %v450
    %v519 = vpack.c.b16 %v453, %v452
    %v520 = vpack.c.b16 %v455, %v454
    %v521 = vpack.c.b16 %v457, %v456
    %586 = vmatprep.subr.bf16.mxu0 0
    %587 = vmatpush1.bf16.msra.mxu0 %v465
    %588 = vmatprep.subr.bf16.mxu0 0
    %589 = vmatpush1.bf16.msra.mxu0 %v464
    %590 = vmatprep.subr.bf16.mxu0 0
    %591 = vmatpush1.bf16.msra.mxu0 %v463
    %592 = vmatprep.subr.bf16.mxu0 0
    %593 = vmatpush1.bf16.msra.mxu0 %v462
    %594 = vmatprep.subr.bf16.mxu0 0
    %595 = vmatpush1.bf16.msra.mxu0 %v461
    %596 = vmatprep.subr.bf16.mxu0 0
    %597 = vmatpush1.bf16.msra.mxu0 %v460
    %598 = vmatprep.subr.bf16.mxu0 0
    %599 = vmatpush1.bf16.msra.mxu0 %v459
    %600 = vmatprep.subr.bf16.mxu0 0
    %601 = vmatpush1.bf16.msra.mxu0 %v458
    %602 = vmatprep.subr.bf16.mxu0 0
    %603 = vmatpush2.bf16.msra.mxu0 %v473
    %604 = vmatprep.subr.bf16.mxu0 0
    %605 = vmatpush2.bf16.msra.mxu0 %v472
    %606 = vmatprep.subr.bf16.mxu0 0
    %607 = vmatpush2.bf16.msra.mxu0 %v471
    %608 = vmatprep.subr.bf16.mxu0 0
    %609 = vmatpush2.bf16.msra.mxu0 %v470
    %610 = vmatprep.subr.bf16.mxu0 0
    %611 = vmatpush2.bf16.msra.mxu0 %v469
    %612 = vmatprep.subr.bf16.mxu0 0
    %613 = vmatpush2.bf16.msra.mxu0 %v468
    %614 = vmatprep.subr.bf16.mxu0 0
    %615 = vmatpush2.bf16.msra.mxu0 %v467
    %616 = vmatprep.subr.bf16.mxu0 0
    %617 = vmatpush2.bf16.msra.mxu0 %v466
    %618 = vmatprep.mubr.bf16.mxu0 %v187
    %619 = vmatmul.mubr.bf16.gmra.mxu0 %v186
    %v620 = vpop.f32.mrf.mxu0
    %v621 = vadd.f32 %v172, %v620
    %v622 = vpop.f32.mrf.mxu0
    %v623 = vpop.f32.mrf.mxu0
    %v624 = vpop.f32.mrf.mxu0
    %625 = vdwg.mxu0
    %626 = vmatprep.subr.bf16.mxu0 0
    %627 = vmatpush1.bf16.msra.mxu0 %v481
    %628 = vmatprep.subr.bf16.mxu0 0
    %629 = vmatpush1.bf16.msra.mxu0 %v480
    %630 = vmatprep.subr.bf16.mxu0 0
    %631 = vmatpush1.bf16.msra.mxu0 %v479
    %632 = vmatprep.subr.bf16.mxu0 0
    %633 = vmatpush1.bf16.msra.mxu0 %v478
    %634 = vmatprep.subr.bf16.mxu0 0
    %635 = vmatpush1.bf16.msra.mxu0 %v477
    %636 = vmatprep.subr.bf16.mxu0 0
    %637 = vmatpush1.bf16.msra.mxu0 %v476
    %638 = vmatprep.subr.bf16.mxu0 0
    %639 = vmatpush1.bf16.msra.mxu0 %v475
    %640 = vmatprep.subr.bf16.mxu0 0
    %641 = vmatpush1.bf16.msra.mxu0 %v474
    %642 = vmatprep.subr.bf16.mxu0 0
    %643 = vmatpush2.bf16.msra.mxu0 %v489
    %644 = vmatprep.subr.bf16.mxu0 0
    %645 = vmatpush2.bf16.msra.mxu0 %v488
    %646 = vmatprep.subr.bf16.mxu0 0
    %647 = vmatpush2.bf16.msra.mxu0 %v487
    %648 = vmatprep.subr.bf16.mxu0 0
    %649 = vmatpush2.bf16.msra.mxu0 %v486
    %650 = vmatprep.subr.bf16.mxu0 0
    %651 = vmatpush2.bf16.msra.mxu0 %v485
    %652 = vmatprep.subr.bf16.mxu0 0
    %653 = vmatpush2.bf16.msra.mxu0 %v484
    %654 = vmatprep.subr.bf16.mxu0 0
    %655 = vmatpush2.bf16.msra.mxu0 %v483
    %656 = vmatprep.subr.bf16.mxu0 0
    %657 = vmatpush2.bf16.msra.mxu0 %v482
    %658 = vmatprep.mubr.bf16.mxu0 %v189
    %659 = vmatmul.mubr.bf16.gmra.mxu0 %v188
    %v660 = vpop.f32.mrf.mxu0
    %v661 = vadd.f32 %v621, %v660
    %v662 = vpop.f32.mrf.mxu0
    %v663 = vpop.f32.mrf.mxu0
    %v664 = vpop.f32.mrf.mxu0
    %665 = vdwg.mxu0
    %666 = vmatprep.subr.bf16.mxu0 0
    %667 = vmatpush1.bf16.msra.mxu0 %v497
    %668 = vmatprep.subr.bf16.mxu0 0
    %669 = vmatpush1.bf16.msra.mxu0 %v496
    %670 = vmatprep.subr.bf16.mxu0 0
    %671 = vmatpush1.bf16.msra.mxu0 %v495
    %672 = vmatprep.subr.bf16.mxu0 0
    %673 = vmatpush1.bf16.msra.mxu0 %v494
    %674 = vmatprep.subr.bf16.mxu0 0
    %675 = vmatpush1.bf16.msra.mxu0 %v493
    %676 = vmatprep.subr.bf16.mxu0 0
    %677 = vmatpush1.bf16.msra.mxu0 %v492
    %678 = vmatprep.subr.bf16.mxu0 0
    %679 = vmatpush1.bf16.msra.mxu0 %v491
    %680 = vmatprep.subr.bf16.mxu0 0
    %681 = vmatpush1.bf16.msra.mxu0 %v490
    %682 = vmatprep.subr.bf16.mxu0 0
    %683 = vmatpush2.bf16.msra.mxu0 %v505
    %684 = vmatprep.subr.bf16.mxu0 0
    %685 = vmatpush2.bf16.msra.mxu0 %v504
    %686 = vmatprep.subr.bf16.mxu0 0
    %687 = vmatpush2.bf16.msra.mxu0 %v503
    %688 = vmatprep.subr.bf16.mxu0 0
    %689 = vmatpush2.bf16.msra.mxu0 %v502
    %690 = vmatprep.subr.bf16.mxu0 0
    %691 = vmatpush2.bf16.msra.mxu0 %v501
    %692 = vmatprep.subr.bf16.mxu0 0
    %693 = vmatpush2.bf16.msra.mxu0 %v500
    %694 = vmatprep.subr.bf16.mxu0 0
    %695 = vmatpush2.bf16.msra.mxu0 %v499
    %696 = vmatprep.subr.bf16.mxu0 0
    %697 = vmatpush2.bf16.msra.mxu0 %v498
    %698 = vmatprep.mubr.bf16.mxu0 %v191
    %699 = vmatmul.mubr.bf16.gmra.mxu0 %v190
    %v700 = vpop.f32.mrf.mxu0
    %v701 = vadd.f32 %v661, %v700
    %v702 = vpop.f32.mrf.mxu0
    %v703 = vpop.f32.mrf.mxu0
    %v704 = vpop.f32.mrf.mxu0
    %705 = vdwg.mxu0
    %706 = vmatprep.subr.bf16.mxu0 0
    %707 = vmatpush1.bf16.msra.mxu0 %v513
    %708 = vmatprep.subr.bf16.mxu0 0
    %709 = vmatpush1.bf16.msra.mxu0 %v512
    %710 = vmatprep.subr.bf16.mxu0 0
    %711 = vmatpush1.bf16.msra.mxu0 %v511
    %712 = vmatprep.subr.bf16.mxu0 0
    %713 = vmatpush1.bf16.msra.mxu0 %v510
    %714 = vmatprep.subr.bf16.mxu0 0
    %715 = vmatpush1.bf16.msra.mxu0 %v509
    %716 = vmatprep.subr.bf16.mxu0 0
    %717 = vmatpush1.bf16.msra.mxu0 %v508
    %718 = vmatprep.subr.bf16.mxu0 0
    %719 = vmatpush1.bf16.msra.mxu0 %v507
    %720 = vmatprep.subr.bf16.mxu0 0
    %721 = vmatpush1.bf16.msra.mxu0 %v506
    %722 = vmatprep.subr.bf16.mxu0 0
    %723 = vmatpush2.bf16.msra.mxu0 %v521
    %724 = vmatprep.subr.bf16.mxu0 0
    %725 = vmatpush2.bf16.msra.mxu0 %v520
    %726 = vmatprep.subr.bf16.mxu0 0
    %727 = vmatpush2.bf16.msra.mxu0 %v519
    %728 = vmatprep.subr.bf16.mxu0 0
    %729 = vmatpush2.bf16.msra.mxu0 %v518
    %730 = vmatprep.subr.bf16.mxu0 0
    %731 = vmatpush2.bf16.msra.mxu0 %v517
    %732 = vmatprep.subr.bf16.mxu0 0
    %733 = vmatpush2.bf16.msra.mxu0 %v516
    %734 = vmatprep.subr.bf16.mxu0 0
    %735 = vmatpush2.bf16.msra.mxu0 %v515
    %736 = vmatprep.subr.bf16.mxu0 0
    %737 = vmatpush2.bf16.msra.mxu0 %v514
    %738 = vmatprep.mubr.bf16.mxu0 %v193
    %739 = vmatmul.mubr.bf16.gmra.mxu0 %v192
    %v740 = vpop.f32.mrf.mxu0
    %v741 = vadd.f32 %v701, %v740
    %v742 = vpop.f32.mrf.mxu0
    %v743 = vpop.f32.mrf.mxu0
    %v744 = vpop.f32.mrf.mxu0
    %745 = vdwg.mxu0
    %v746 = vmax.f32 %v741, 0.0
    %v747 = vpack.c.bf16 %v746, %v746
    %v748 = vld [vmem:[%s3] sm:$0xf]
    %v749 = vld [vmem:[%s3 + $0x4] sm:$0xf]
    %v750 = vld [vmem:[%s3 + $0x8] sm:$0xf]
    %v751 = vld [vmem:[%s3 + $0xc] sm:$0xf]
    %v752 = vld [vmem:[%s3 + $0x10] sm:$0xf]
    %v753 = vld [vmem:[%s3 + $0x14] sm:$0xf]
    %v754 = vld [vmem:[%s3 + $0x18] sm:$0xf]
    %v755 = vld [vmem:[%s3 + $0x1c] sm:$0xf]
    %v756 = vld [vmem:[%s3 + $0x20] sm:$0xf]
    %v757 = vld [vmem:[%s3 + $0x24] sm:$0xf]
    %v758 = vld [vmem:[%s3 + $0x28] sm:$0xf]
    %v759 = vld [vmem:[%s3 + $0x2c] sm:$0xf]
    %v760 = vld [vmem:[%s3 + $0x30] sm:$0xf]
    %v761 = vld [vmem:[%s3 + $0x34] sm:$0xf]
    %v762 = vld [vmem:[%s3 + $0x38] sm:$0xf]
    %v763 = vld [vmem:[%s3 + $0x3c] sm:$0xf]
    %v764 = vld [vmem:[%s4] sm:$0x1]
    %v766 = vlaneseq
    %v767 = vshrl.u32 %v766, 7
    %v768 = vsub.s32 0, %v767
    %v769 = vrot.slane %v764, %v768
    %v787 = vunpack.c.l.b16 %v748
    %v788 = vunpack.c.l.b16 %v749
    %v789 = vunpack.c.l.b16 %v750
    %v790 = vunpack.c.l.b16 %v751
    %v791 = vunpack.c.l.b16 %v752
    %v792 = vunpack.c.l.b16 %v753
    %v793 = vunpack.c.l.b16 %v754
    %v794 = vunpack.c.l.b16 %v755
    %v795 = vunpack.c.l.b16 %v756
    %v796 = vunpack.c.l.b16 %v757
    %v797 = vunpack.c.l.b16 %v758
    %v798 = vunpack.c.l.b16 %v759
    %v799 = vunpack.c.l.b16 %v760
    %v800 = vunpack.c.l.b16 %v761
    %v801 = vunpack.c.l.b16 %v762
    %v802 = vunpack.c.l.b16 %v763
    %v803 = vpack.c.b16 %v788, %v787
    %v804 = vpack.c.b16 %v790, %v789
    %v805 = vpack.c.b16 %v792, %v791
    %v806 = vpack.c.b16 %v794, %v793
    %v807 = vpack.c.b16 %v796, %v795
    %v808 = vpack.c.b16 %v798, %v797
    %v809 = vpack.c.b16 %v800, %v799
    %v810 = vpack.c.b16 %v802, %v801
    %819 = vmatprep.subr.bf16.mxu0 0
    %820 = vmatpush1.bf16.msra.mxu0 %v810
    %821 = vmatprep.subr.bf16.mxu0 0
    %822 = vmatpush1.bf16.msra.mxu0 %v809
    %823 = vmatprep.subr.bf16.mxu0 0
    %824 = vmatpush1.bf16.msra.mxu0 %v808
    %825 = vmatprep.subr.bf16.mxu0 0
    %826 = vmatpush1.bf16.msra.mxu0 %v807
    %827 = vmatprep.subr.bf16.mxu0 0
    %828 = vmatpush1.bf16.msra.mxu0 %v806
    %829 = vmatprep.subr.bf16.mxu0 0
    %830 = vmatpush1.bf16.msra.mxu0 %v805
    %831 = vmatprep.subr.bf16.mxu0 0
    %832 = vmatpush1.bf16.msra.mxu0 %v804
    %833 = vmatprep.subr.bf16.mxu0 0
    %834 = vmatpush1.bf16.msra.mxu0 %v803
    %835 = vmatprep.subr.bf16.mxu0 0
    %836 = vmatpush2.bf16.msra.mxu0 0
    %837 = vmatprep.subr.bf16.mxu0 0
    %838 = vmatpush2.bf16.msra.mxu0 0
    %839 = vmatprep.subr.bf16.mxu0 0
    %840 = vmatpush2.bf16.msra.mxu0 0
    %841 = vmatprep.subr.bf16.mxu0 0
    %842 = vmatpush2.bf16.msra.mxu0 0
    %843 = vmatprep.subr.bf16.mxu0 0
    %844 = vmatpush2.bf16.msra.mxu0 0
    %845 = vmatprep.subr.bf16.mxu0 0
    %846 = vmatpush2.bf16.msra.mxu0 0
    %847 = vmatprep.subr.bf16.mxu0 0
    %848 = vmatpush2.bf16.msra.mxu0 0
    %849 = vmatprep.subr.bf16.mxu0 0
    %850 = vmatpush2.bf16.msra.mxu0 0
    %851 = vmatprep.mubr.bf16.mxu0 0
    %852 = vmatmul.mubr.bf16.gmra.mxu0 %v747
    %v853 = vpop.f32.mrf.mxu0
    %v854 = vadd.f32 %v769, %v853
    %v855 = vpop.f32.mrf.mxu0
    %v856 = vpop.f32.mrf.mxu0
    %v857 = vpop.f32.mrf.mxu0
    %858 = vdwg.mxu0
    %859 = vst [vmem:[%s5] sm:$0xff] %v854
    // Predicated region
    $region26: #{_pallas_forward.1} parent=1 // pred_check
      _
    $region27: #{_pallas_forward.1} parent=1 // pred_check_branch
      %861 = sbr.rel (0) target = $region29
    $region28: #{_pallas_forward.1} parent=1 // pred_region
      _
    $region29: #{_pallas_forward.1} parent=1 // pred_fallthru
      _
    // Predicated region
    $region30: #{_pallas_forward.1} parent=1 // pred_check
      _
    $region31: #{_pallas_forward.1} parent=1 // pred_check_branch
      %863 = sbr.rel (0) target = $region33
    $region32: #{_pallas_forward.1} parent=1 // pred_region
      _
    $region33: #{_pallas_forward.1} parent=1 // pred_fallthru
      _
    %864 = vsyncpa [#allocation3], 1

</llo_original>
